<compile_context>
chip_gen: v6e
topology: v6e:2x2x1
jax: 0.10.0
libtpu: 0.0.40
codegen_flags: <defaults>
</compile_context>

<pallas_src>
import functools

import jax
import jax.numpy as jnp
from jax import lax
from jax.experimental import pallas as pl
from jax.experimental.pallas import tpu as pltpu

LANES = 128
# (2048, 128) f32 per input block: 2 inputs x 2 pipeline buffers = 4 MiB VMEM,
# plus a ~1 MiB resident accumulator tile -- safe on v5e/v6e/v7x.
MAX_BLOCK_ROWS = 2048


def _focal_kernel(p_ref, y_ref, out_ref, *, gamma, block_rows, steps_per_chunk,
                  n_valid, need_mask):
    s = pl.program_id(1)

    # out_ref is resident across the (arbitrary) reduction axis `s`:
    # zero it on the first step of each chunk.
    @pl.when(s == 0)
    def _():
        out_ref[...] = jnp.zeros_like(out_ref)

    # Cast inside the kernel so bf16 producers only pay bf16 HBM traffic.
    p = p_ref[...].astype(jnp.float32)
    y = y_ref[...].astype(jnp.float32)

    p_t = y * p + (1.0 - y) * (1.0 - p)
    one_minus_pt = 1.0 - p_t
    # gamma stays a Python int -> lax.integer_pow (a few VPU multiplies),
    # keeping the single EUP slot free for the per-element log.
    if isinstance(gamma, int):
        focal_w = lax.integer_pow(one_minus_pt, gamma)
    else:
        focal_w = one_minus_pt ** gamma
    # NOTE: like the PyTorch reference, no eps clamp -- log(0) -> -inf if p_t
    # underflows.
    losses = -focal_w * jnp.log(p_t)

    if need_mask:
        # Mask the lane-padding tail and any out-of-range rows of a partial
        # edge block (their contents are unspecified) before accumulating.
        c = pl.program_id(0)
        row_base = (c * steps_per_chunk + s) * block_rows
        row_ids = lax.broadcasted_iota(jnp.int32, (block_rows, LANES), 0)
        lane_ids = lax.broadcasted_iota(jnp.int32, (block_rows, LANES), 1)
        flat_ids = (row_base + row_ids) * LANES + lane_ids
        losses = jnp.where(flat_ids < n_valid, losses, 0.0)

    # Pure VPU elementwise accumulation (no per-step cross-lane reduce, no
    # SMEM scalar read-modify-write).
    out_ref[...] += losses


def focal_loss(p, y, gamma=5):
    """Pallas TPU implementation of FocalLoss.forward (mean reduction)."""
    assert p.shape == y.shape
    n_elems = int(p.size)
    assert n_elems > 0

    # Flatten to (rows, 128).  The contiguous reshape is free; a padding copy
    # is only materialized when the element count is not a multiple of 128
    # (the padded tail is masked off inside the kernel, so its value is moot).
    pf = p.reshape(-1)
    yf = y.reshape(-1)
    lane_pad = (-n_elems) % LANES
    if lane_pad:
        pf = jnp.pad(pf, (0, lane_pad))
        yf = jnp.pad(yf, (0, lane_pad))
    rows = (n_elems + lane_pad) // LANES
    p2 = pf.reshape(rows, LANES)
    y2 = yf.reshape(rows, LANES)

    # Large blocks so the kernel is HBM-bandwidth bound rather than dominated
    # by per-grid-step overhead / tiny DMAs.
    block_rows = rows if rows <= MAX_BLOCK_ROWS else MAX_BLOCK_ROWS
    num_blocks = pl.cdiv(rows, block_rows)

    # v7x: a leading "parallel" chunk axis lets the row-block loop be sharded
    # across both TensorCores (each chunk owns its own resident accumulator
    # tile and partial-sum output).  Split only when the block count divides
    # evenly so every input block index stays in bounds.
    nchunks = 2 if (num_blocks >= 2 and num_blocks % 2 == 0) else 1
    steps_per_chunk = num_blocks // nchunks

    need_mask = (lane_pad != 0) or (num_blocks * block_rows != rows)

    kernel = functools.partial(
        _focal_kernel, gamma=gamma, block_rows=block_rows,
        steps_per_chunk=steps_per_chunk, n_valid=n_elems, need_mask=need_mask)

    partials = pl.pallas_call(
        kernel,
        out_shape=jax.ShapeDtypeStruct((nchunks * block_rows, LANES),
                                       jnp.float32),
        grid_spec=pltpu.PrefetchScalarGridSpec(
            num_scalar_prefetch=0,
            grid=(nchunks, steps_per_chunk),
            in_specs=[
                pl.BlockSpec((block_rows, LANES),
                             lambda c, s: (c * steps_per_chunk + s, 0)),
                pl.BlockSpec((block_rows, LANES),
                             lambda c, s: (c * steps_per_chunk + s, 0)),
            ],
            out_specs=pl.BlockSpec((block_rows, LANES), lambda c, s: (c, 0)),
        ),
        compiler_params=pltpu.CompilerParams(
            dimension_semantics=("parallel", "arbitrary"),
            vmem_limit_bytes=32 * 1024 * 1024,
        ),
    )(p2, y2)

    # Tiny epilogue: one reduce over the per-chunk partial-sum tiles + mean
    # over the ORIGINAL element count.
    return jnp.sum(partials) / jnp.float32(n_elems)


if __name__ == "__main__":
    key = jax.random.PRNGKey(0)
    k1, k2 = jax.random.split(key)

    B, C, H, W = 2, 4, 16, 16
    # p must be a probability in (0, 1); y is a binary target.
    p = jax.nn.sigmoid(jax.random.normal(k1, (B, C, H, W), jnp.float32))
    y = (jax.random.uniform(k2, (B, C, H, W)) > 0.5).astype(jnp.float32)

    loss = focal_loss(p, y, gamma=5)
    jax.block_until_ready(loss)

    # Reference check in plain JAX (same math as the PyTorch module).
    p_t = y * p + (1.0 - y) * (1.0 - p)
    ref = jnp.mean(-((1.0 - p_t) ** 5) * jnp.log(p_t))
    assert jnp.allclose(loss, ref, rtol=1e-5, atol=1e-6), (loss, ref)

    print("KERNEL_OK")
</pallas_src>

<mosaic_0001>
module attributes {stable_mosaic.version = 11 : i64} {
  func.func @_focal_kernel(%arg0: i32, %arg1: i32, %arg2: memref<16x128xf32, #tpu.memory_space<vmem>>, %arg3: memref<16x128xf32, #tpu.memory_space<vmem>>, %arg4: memref<16x128xf32, #tpu.memory_space<vmem>>) attributes {dimension_semantics = [#tpu.dimension_semantics<parallel>, #tpu.dimension_semantics<arbitrary>], iteration_bounds = array<i64: 1, 1>, scalar_prefetch = 0 : i64, scratch_operands = 0 : i64, tpu.core_type = #tpu.core_type<tc>, window_params = [{transform_indices = @transform_0, window_bounds = array<i64: 16, 128>}, {transform_indices = @transform_1, window_bounds = array<i64: 16, 128>}, {transform_indices = @transform_2, window_bounds = array<i64: 16, 128>}]} {
    %c0_i32 = arith.constant 0 : i32
    %0 = arith.cmpi eq, %arg1, %c0_i32 : i32
    %1 = arith.extui %0 : i1 to i32
    %c0_i32_0 = arith.constant 0 : i32
    %2 = arith.cmpi ne, %1, %c0_i32_0 : i32
    scf.if %2 {
      %cst_11 = arith.constant 0.000000e+00 : f32
      %24 = vector.broadcast %cst_11 : f32 to vector<16x128xf32>
      %c0_12 = arith.constant 0 : index
      %c0_13 = arith.constant 0 : index
      %25 = vector.load %arg4[%c0_12, %c0_13] : memref<16x128xf32, #tpu.memory_space<vmem>>, vector<16x128xf32>
      tpu.vector_store %arg4[%c0_12, %c0_13], %24 {strides = array<i32>} : memref<16x128xf32, #tpu.memory_space<vmem>>, vector<16x128xf32>,
    } else {
    }
    %c0 = arith.constant 0 : index
    %c0_1 = arith.constant 0 : index
    %3 = vector.load %arg2[%c0, %c0_1] : memref<16x128xf32, #tpu.memory_space<vmem>>, vector<16x128xf32>
    %c0_2 = arith.constant 0 : index
    %c0_3 = arith.constant 0 : index
    %4 = vector.load %arg3[%c0_2, %c0_3] : memref<16x128xf32, #tpu.memory_space<vmem>>, vector<16x128xf32>
    %5 = arith.mulf %4, %3 : vector<16x128xf32>
    %cst = arith.constant 1.000000e+00 : f32
    %6 = vector.broadcast %cst : f32 to vector<16x128xf32>
    %7 = arith.subf %6, %4 : vector<16x128xf32>
    %cst_4 = arith.constant 1.000000e+00 : f32
    %8 = vector.broadcast %cst_4 : f32 to vector<16x128xf32>
    %9 = arith.subf %8, %3 : vector<16x128xf32>
    %10 = arith.mulf %7, %9 : vector<16x128xf32>
    %11 = arith.addf %5, %10 : vector<16x128xf32>
    %cst_5 = arith.constant 1.000000e+00 : f32
    %12 = vector.broadcast %cst_5 : f32 to vector<16x128xf32>
    %13 = arith.subf %12, %11 : vector<16x128xf32>
    %14 = arith.mulf %13, %13 : vector<16x128xf32>
    %15 = arith.mulf %14, %14 : vector<16x128xf32>
    %16 = arith.mulf %13, %15 : vector<16x128xf32>
    %cst_6 = arith.constant 0.000000e+00 : f32
    %17 = vector.broadcast %cst_6 : f32 to vector<16x128xf32>
    %18 = arith.subf %17, %16 : vector<16x128xf32>
    %19 = math.log %11 : vector<16x128xf32>
    %20 = arith.mulf %18, %19 : vector<16x128xf32>
    %c0_7 = arith.constant 0 : index
    %c0_8 = arith.constant 0 : index
    %21 = vector.load %arg4[%c0_7, %c0_8] : memref<16x128xf32, #tpu.memory_space<vmem>>, vector<16x128xf32>
    %22 = arith.addf %21, %20 : vector<16x128xf32>
    %c0_9 = arith.constant 0 : index
    %c0_10 = arith.constant 0 : index
    %23 = vector.load %arg4[%c0_9, %c0_10] : memref<16x128xf32, #tpu.memory_space<vmem>>, vector<16x128xf32>
    tpu.vector_store %arg4[%c0_9, %c0_10], %22 {strides = array<i32>} : memref<16x128xf32, #tpu.memory_space<vmem>>, vector<16x128xf32>,
    return
  }
  func.func @transform_0(%arg0: i32, %arg1: i32) -> (i32, i32) {
    %c1_i32 = arith.constant 1 : i32
    %0 = arith.muli %arg0, %c1_i32 : i32
    %1 = arith.addi %0, %arg1 : i32
    %c0_i32 = arith.constant 0 : i32
    %c0_i32_0 = arith.constant 0 : i32
    return %1, %c0_i32 : i32, i32
  }
  func.func @transform_1(%arg0: i32, %arg1: i32) -> (i32, i32) {
    %c1_i32 = arith.constant 1 : i32
    %0 = arith.muli %arg0, %c1_i32 : i32
    %1 = arith.addi %0, %arg1 : i32
    %c0_i32 = arith.constant 0 : i32
    %c0_i32_0 = arith.constant 0 : i32
    return %1, %c0_i32 : i32, i32
  }
  func.func @transform_2(%arg0: i32, %arg1: i32) -> (i32, i32) {
    %c0_i32 = arith.constant 0 : i32
    %c0_i32_0 = arith.constant 0 : i32
    return %arg0, %c0_i32 : i32, i32
  }
}

</mosaic_0001>

<llo_original>
// kernel: tpu_custom_call.1
$region0: #{tpu_custom_call.1}
  #allocation0 [shape = 'u32[]', space=smem, size = 0x4, offset = 0x4, fixed_abs, tag = 'smem constant byte address 0x4 - core index']
  #allocation1 [shape = 'u32[144,128]{1,0:T(1,128)}', space=vmem, size = 0x12000, scoped, tag = 'internal scratch']
  %s0 = inlined_call_operand.hbm [shape: f32[16,128], index: 0, kind: input, shape index: {}]
  %s1 = inlined_call_operand.hbm [shape: f32[16,128], index: 1, kind: input, shape index: {}]
  %s2 = inlined_call_operand.hbm [shape: f32[16,128], index: 2, kind: output, shape index: {}]
  %s3 = sld [smem:[#allocation0]]
  $region30: #{tpu_custom_call.1} parent=0
    _
  %s5 = ssub.s32 1, %s3
  %s6 = scalar_select 0, %s5, %s3
  $region1: #{tpu_custom_call.1} parent=0
    #allocation2 [shape = 'u8[8192]{0}', space=vmem, size = 0x2000, scoped, tag = 'input window, operand 0, single buffered']
    #allocation3 [shape = 's32[1]{0}', space=sflag, size = 0x4, scoped, tag = 'scoped memory for tpu_custom_call.1']
    #allocation4 [shape = 's32[1]{0}', space=sflag, size = 0x4, scoped, tag = 'scoped memory for tpu_custom_call.1']
    #allocation5 [shape = 'u8[8192]{0}', space=vmem, size = 0x2000, scoped, tag = 'input window, operand 1, single buffered']
    #allocation6 [shape = 's32[1]{0}', space=sflag, size = 0x4, scoped, tag = 'scoped memory for tpu_custom_call.1']
    #allocation7 [shape = 'u8[8192]{0}', space=vmem, size = 0x2000, scoped, tag = 'output window, operand 0, single buffered']
    %7 = vsyncpa [#allocation3], 0
    %8 = vsyncpa [#allocation6], 0
    %9 = vsyncpa [#allocation4], 0
    // Predicated region
    $region2: #{tpu_custom_call.1} parent=1 // pred_check
      _
    $region3: #{tpu_custom_call.1} parent=1 // pred_check_branch
      %11 = sbr.rel (0) target = $region5
    $region4: #{tpu_custom_call.1} parent=1 // pred_region
      %s12 = sadd.s32 0, 0
      %s13 = smul.u32 2, %s12
      %s15 = ssub.s32 256, 256
      %16 = vsyncadd [#allocation3], %s15
      %s17 = smul.addr %s13, 128
      %s18 = scalar_lea.hbm %s0, %s17
      %s19 = sshll.u32 [#allocation2], 4
      %s20 = int_to_ptr.vmem [resolvable:$true] %s19
      %25 = dma.hbm_to_vmem [thread:$0]  %s18, 256, %s20, [#allocation3], 128, 128, 8
    $region5: #{tpu_custom_call.1} parent=1 // pred_fallthru
      _
    // Predicated region
    $region6: #{tpu_custom_call.1} parent=1 // pred_check
      _
    $region7: #{tpu_custom_call.1} parent=1 // pred_check_branch
      %27 = sbr.rel (0) target = $region9
    $region8: #{tpu_custom_call.1} parent=1 // pred_region
      %s28 = sadd.s32 0, 0
      %s29 = smul.u32 2, %s28
      %s31 = ssub.s32 256, 256
      %32 = vsyncadd [#allocation6], %s31
      %s33 = smul.addr %s29, 128
      %s34 = scalar_lea.hbm %s1, %s33
      %s35 = sshll.u32 [#allocation5], 4
      %s36 = int_to_ptr.vmem [resolvable:$true] %s35
      %41 = dma.hbm_to_vmem [thread:$0]  %s34, 256, %s36, [#allocation6], 128, 128, 8
    $region9: #{tpu_custom_call.1} parent=1 // pred_fallthru
      _
    // Predicated region
    $region10: #{tpu_custom_call.1} parent=1 // pred_check
      _
    $region11: #{tpu_custom_call.1} parent=1 // pred_check_branch
      %43 = sbr.rel (0) target = $region13
    $region12: #{tpu_custom_call.1} parent=1 // pred_region
      %44 = dma.done [#allocation3], 256
    $region13: #{tpu_custom_call.1} parent=1 // pred_fallthru
      _
    // Predicated region
    $region14: #{tpu_custom_call.1} parent=1 // pred_check
      _
    $region15: #{tpu_custom_call.1} parent=1 // pred_check_branch
      %46 = sbr.rel (0) target = $region17
    $region16: #{tpu_custom_call.1} parent=1 // pred_region
      %47 = dma.done [#allocation6], 256
    $region17: #{tpu_custom_call.1} parent=1 // pred_fallthru
      _
    %s48 = sadd.s32 0, 0
    %s49 = smul.u32 2, %s48
    %s50 = sadd.s32 0, 0
    %s51 = smul.u32 2, %s50
    %p52 = scmp.eq.s32.totalorder 0, 0
    // Predicated region
    $region18: #{tpu_custom_call.1} parent=1 // pred_check
      %p53 = pneg %p52
    $region19: #{tpu_custom_call.1} parent=1 // pred_check_branch
      %55 = sbr.rel (%p53) target = $region21
    $region20: #{tpu_custom_call.1} parent=1 // pred_region
      %56 = vst [vmem:[#allocation7] sm:$0xff] 0.0
      %57 = vst [vmem:[#allocation7 + $0x8] sm:$0xff] 0.0
    $region21: #{tpu_custom_call.1} parent=1 // pred_fallthru
      _
    %v58 = vld [vmem:[#allocation2] sm:$0xff]
    %v59 = vld [vmem:[#allocation2 + $0x8] sm:$0xff]
    %v60 = vld [vmem:[#allocation5] sm:$0xff]
    %v61 = vld [vmem:[#allocation5 + $0x8] sm:$0xff]
    %v62 = vmul.f32 %v60, %v58
    %v63 = vmul.f32 %v61, %v59
    %v64 = vsub.f32 1.0, %v60
    %v65 = vsub.f32 1.0, %v61
    %v66 = vsub.f32 1.0, %v58
    %v67 = vsub.f32 1.0, %v59
    %v68 = vmul.f32 %v64, %v66
    %v69 = vmul.f32 %v65, %v67
    %v70 = vadd.f32 %v62, %v68
    %v71 = vadd.f32 %v63, %v69
    %v72 = vsub.f32 1.0, %v70
    %v73 = vsub.f32 1.0, %v71
    %v74 = vmul.f32 %v72, %v72
    %v75 = vmul.f32 %v73, %v73
    %v76 = vmul.f32 %v74, %v74
    %v77 = vmul.f32 %v75, %v75
    %v78 = vmul.f32 %v72, %v76
    %v79 = vmul.f32 %v73, %v77
    %v80 = vsub.f32 0.0, %v78
    %v81 = vsub.f32 0.0, %v79
    %v82 = vlog2.pop %v70
    %v83 = vmul.f32 %v82, 0.6931472
    %v84 = vlog2.pop %v71
    %v85 = vmul.f32 %v84, 0.6931472
    %v86 = vmul.f32 %v80, %v83
    %v87 = vmul.f32 %v81, %v85
    %v88 = vld [vmem:[#allocation7] sm:$0xff]
    %v89 = vld [vmem:[#allocation7 + $0x8] sm:$0xff]
    %v90 = vadd.f32 %v88, %v86
    %v91 = vadd.f32 %v89, %v87
    %92 = vst [vmem:[#allocation7] sm:$0xff] %v90
    %93 = vst [vmem:[#allocation7 + $0x8] sm:$0xff] %v91
    // Predicated region
    $region22: #{tpu_custom_call.1} parent=1 // pred_check
      _
    $region23: #{tpu_custom_call.1} parent=1 // pred_check_branch
      %95 = sbr.rel (0) target = $region25
    $region24: #{tpu_custom_call.1} parent=1 // pred_region
      %s97 = ssub.s32 256, 256
      %98 = vsyncadd [#allocation4], %s97
      %s99 = sshll.u32 [#allocation7], 4
      %s100 = int_to_ptr.vmem [resolvable:$true] %s99
      %105 = dma.vmem_to_hbm [thread:$0]  %s100, 256, %s2, [#allocation4], 128, 128, 8
    $region25: #{tpu_custom_call.1} parent=1 // pred_fallthru
      _
    // Predicated region
    $region26: #{tpu_custom_call.1} parent=1 // pred_check
      _
    $region27: #{tpu_custom_call.1} parent=1 // pred_check_branch
      %107 = sbr.rel (0) target = $region29
    $region28: #{tpu_custom_call.1} parent=1 // pred_region
      %108 = dma.done [#allocation4], 256
    $region29: #{tpu_custom_call.1} parent=1 // pred_fallthru
      _
    %109 = vsyncpa [#allocation3], 1
    %110 = vsyncpa [#allocation6], 1
    %111 = vsyncpa [#allocation4], 1

</llo_original>
